<compile_context>
chip_gen: v6e
topology: v6e:2x2x1
jax: 0.10.0
libtpu: 0.0.40
codegen_flags: <defaults>
</compile_context>

<pallas_src>
import functools

import jax
import jax.numpy as jnp
from jax.experimental import pallas as pl
from jax.experimental.pallas import tpu as pltpu

LEAKY_SLOPE = 0.01   # torch.nn.LeakyReLU default
LN_EPS = 1e-5        # torch.nn.LayerNorm default


def _round_up(x, m):
    return (x + m - 1) // m * m


def _device_kind():
    try:
        return jax.devices()[0].device_kind.lower()
    except Exception:
        return ""


def _select_tile_b(B, kind):
    """Batch tile: generation-aware cap + >=2 grid steps on 2-TensorCore chips."""
    two_cores = any(t in kind for t in ("v4", "v5p", "7x", "v7"))
    if "v6" in kind:
        cap = 512          # per-step overhead amortizes; VMEM is 128 MiB on v6e
    else:
        cap = 256          # v5e: 4x128 MXU + 16 MiB scoped default; safe default
    b8 = _round_up(max(B, 8), 8)
    tile = min(b8, cap)
    if two_cores and b8 >= 16:
        # "parallel" batch axis only shards across TCs if the grid has >=2 steps.
        tile = min(tile, _round_up(pl.cdiv(b8, 2), 8))
    return tile


def _film_kernel(n_extract, d_model, d_split, x_ref, *refs):
    """refs = [(wT, aff) * n_extract, head_wT, head_b, gamma_ref, beta_ref].

    aff packs [bias; ln_gamma; ln_beta] as a (3, d_out) f32 block.
    """
    h = x_ref[...]                                     # bf16 matmul input
    idx = 0
    # bio_extractor: statically unrolled (layer count is a compile-time constant)
    for _ in range(n_extract):
        wT = refs[idx][...]                            # (d_in, d_out)  bf16
        aff = refs[idx + 1][...]                       # (3, d_out)     f32
        idx += 2
        # Linear: bf16 MXU inputs, f32 accumulation
        z = jnp.dot(h, wT, preferred_element_type=jnp.float32) + aff[0:1, :]
        # LayerNorm (biased variance) with fused scale/shift
        mu = jnp.mean(z, axis=-1, keepdims=True)
        ms = jnp.mean(z * z, axis=-1, keepdims=True)
        var = jnp.maximum(ms - mu * mu, 0.0)
        s = jax.lax.rsqrt(var + LN_EPS) * aff[1:2, :]
        t = aff[2:3, :] - mu * s
        z = z * s + t
        # LeakyReLU
        z = jnp.maximum(z, LEAKY_SLOPE * z)
        h = z.astype(wT.dtype)                         # bf16 for next matmul

    head_wT = refs[idx][...]                           # (d_last, d_split + d_model) bf16
    head_b = refs[idx + 1][...]                        # (1, d_split + d_model)      f32
    gamma_ref = refs[idx + 2]
    beta_ref = refs[idx + 3]

    # Fused gamma/beta head: one MXU matmul, split at a lane-aligned boundary.
    gb = jnp.dot(h, head_wT, preferred_element_type=jnp.float32) + head_b
    gamma_ref[...] = gb[:, :d_model].astype(gamma_ref.dtype)
    beta_ref[...] = gb[:, d_split:d_split + d_model].astype(beta_ref.dtype)


def init_film_params(key, d_bio, d_model):
    """Deterministic synthetic params matching FiLM.__init__ shapes (weights
    stored pre-transposed as (in, out))."""
    extractor = []
    d = d_bio
    while d * 2 < d_model:
        key, k_w, k_b = jax.random.split(key, 3)
        wT = jax.random.normal(k_w, (d, 2 * d), jnp.float32) / jnp.sqrt(float(d))
        b = jax.random.normal(k_b, (1, 2 * d), jnp.float32) * 0.01
        ln_g = jnp.ones((1, 2 * d), jnp.float32)
        ln_b = jnp.zeros((1, 2 * d), jnp.float32)
        extractor.append((wT, b, ln_g, ln_b))
        d = 2 * d
    key, kgw, kgb, kbw, kbb = jax.random.split(key, 5)
    return {
        "extractor": extractor,
        "gamma_wT": jax.random.normal(kgw, (d, d_model), jnp.float32) / jnp.sqrt(float(d)),
        "gamma_b": jax.random.normal(kgb, (1, d_model), jnp.float32) * 0.01,
        "beta_wT": jax.random.normal(kbw, (d, d_model), jnp.float32) / jnp.sqrt(float(d)),
        "beta_b": jax.random.normal(kbb, (1, d_model), jnp.float32) * 0.01,
    }


def prepare_film_params(params, d_model, matmul_dtype=jnp.bfloat16):
    """One-time prep: cast weights to the matmul dtype, pack per-layer
    (bias, ln_gamma, ln_beta) into a (3, d_out) block, fuse gamma/beta heads
    into a single weight with the gamma half padded to a 128-aligned width."""
    layers = []
    for wT, b, ln_g, ln_b in params["extractor"]:
        layers.append((wT.astype(matmul_dtype),
                       jnp.concatenate([b, ln_g, ln_b], axis=0)))   # (3, d_out) f32

    d_split = _round_up(max(d_model, 1), 128)   # lane-aligned gamma/beta boundary
    pad = d_split - d_model
    gamma_wT, gamma_b = params["gamma_wT"], params["gamma_b"]
    if pad:
        gamma_wT = jnp.pad(gamma_wT, ((0, 0), (0, pad)))
        gamma_b = jnp.pad(gamma_b, ((0, 0), (0, pad)))
    head_wT = jnp.concatenate([gamma_wT, params["beta_wT"]], axis=1).astype(matmul_dtype)
    head_b = jnp.concatenate([gamma_b, params["beta_b"]], axis=1)   # f32

    return {"layers": tuple(layers), "head_wT": head_wT, "head_b": head_b,
            "d_model": int(d_model), "d_split": int(d_split)}


def film_forward_pallas(x, prep, *, tile_b=None, single_buffer_weights=False):
    B, d_bio = x.shape
    out_dtype = x.dtype
    d_model = int(prep["d_model"])
    d_split = int(prep["d_split"])
    layers = prep["layers"]
    head_wT = prep["head_wT"]
    head_b = prep["head_b"]
    n_extract = len(layers)
    matmul_dtype = head_wT.dtype

    kind = _device_kind()
    if tile_b is None:
        tile_b = _select_tile_b(B, kind)
    tile_b = _round_up(int(tile_b), 8)
    B_pad = _round_up(B, tile_b)

    x_p = x.astype(matmul_dtype)
    if B_pad != B:
        x_p = jnp.pad(x_p, ((0, B_pad - B), (0, 0)))

    def const_spec(shape):
        # Weights are revisited every grid step (index_map -> (0, 0)); on v7x
        # single-buffering them halves their VMEM footprint for large d_model.
        if single_buffer_weights:
            return pl.BlockSpec(shape, lambda i: (0, 0), pipeline_mode=pl.Buffered(1))
        return pl.BlockSpec(shape, lambda i: (0, 0))

    flat = []
    in_specs = [pl.BlockSpec((tile_b, d_bio), lambda i: (i, 0))]
    for wT, aff in layers:
        flat += [wT, aff]
        in_specs += [const_spec(wT.shape), const_spec(aff.shape)]
    flat += [head_wT, head_b]
    in_specs += [const_spec(head_wT.shape), const_spec(head_b.shape)]

    out_specs = [pl.BlockSpec((tile_b, d_model), lambda i: (i, 0)),
                 pl.BlockSpec((tile_b, d_model), lambda i: (i, 0))]
    out_shape = (jax.ShapeDtypeStruct((B_pad, d_model), out_dtype),
                 jax.ShapeDtypeStruct((B_pad, d_model), out_dtype))

    # Cost estimate so XLA schedules the custom call sensibly.
    flops = 0
    d_in = d_bio
    for wT, _ in layers:
        d_out = wT.shape[1]
        flops += 2 * B_pad * d_in * d_out + 8 * B_pad * d_out
        d_in = d_out
    flops += 2 * B_pad * d_in * head_wT.shape[1]
    weight_bytes = sum(int(p.size) * p.dtype.itemsize for p in flat)
    out_itemsize = jnp.dtype(out_dtype).itemsize
    bytes_accessed = (int(x_p.size) * x_p.dtype.itemsize + weight_bytes
                      + 2 * B_pad * d_model * out_itemsize)

    # Explicit scoped-VMEM sizing when the footprint outgrows the smallest
    # default (16 MiB on v5e). Capped at 64 MiB (<= physical on all gens).
    weight_bufs = 1 if single_buffer_weights else 2
    max_feat = max([d_bio] + [wT.shape[1] for wT, _ in layers] + [head_wT.shape[1]])
    act_bytes = (2 * tile_b * d_bio * x_p.dtype.itemsize
                 + 2 * 2 * tile_b * d_model * out_itemsize
                 + 4 * tile_b * max_feat * 4)
    needed = weight_bufs * weight_bytes + act_bytes
    vmem_limit = None
    if needed > 12 * 1024 * 1024:
        vmem_limit = int(min(2 * needed + (1 << 20), 64 * 1024 * 1024))

    kernel = functools.partial(_film_kernel, n_extract, d_model, d_split)
    gamma, beta = pl.pallas_call(
        kernel,
        out_shape=out_shape,
        grid_spec=pltpu.PrefetchScalarGridSpec(
            num_scalar_prefetch=0,
            grid=(B_pad // tile_b,),
            in_specs=in_specs,
            out_specs=out_specs,
        ),
        compiler_params=pltpu.CompilerParams(
            dimension_semantics=("parallel",),
            vmem_limit_bytes=vmem_limit),
        cost_estimate=pl.CostEstimate(
            flops=int(flops),
            transcendentals=int(B_pad * n_extract),
            bytes_accessed=int(bytes_accessed)),
    )(x_p, *flat)

    if B_pad != B:   # only when the batch is ragged w.r.t. the tile
        gamma, beta = gamma[:B], beta[:B]
    return gamma, beta


def film_forward_ref(x, params, matmul_dtype=jnp.float32):
    """Pure-JAX reference mirroring the PyTorch forward. matmul_dtype=bfloat16
    mirrors the kernel's bf16 MXU inputs (f32 accumulation)."""
    def md(a):
        return a.astype(matmul_dtype).astype(jnp.float32)

    h = x.astype(jnp.float32)
    for wT, b, ln_g, ln_b in params["extractor"]:
        h = jnp.dot(md(h), md(wT)) + b
        mu = jnp.mean(h, axis=-1, keepdims=True)
        var = jnp.mean(jnp.square(h - mu), axis=-1, keepdims=True)
        h = (h - mu) * jax.lax.rsqrt(var + LN_EPS)
        h = h * ln_g + ln_b
        h = jnp.where(h > 0, h, LEAKY_SLOPE * h)
    gamma = jnp.dot(md(h), md(params["gamma_wT"])) + params["gamma_b"]
    beta = jnp.dot(md(h), md(params["beta_wT"])) + params["beta_b"]
    return gamma, beta


if __name__ == "__main__":
    key = jax.random.PRNGKey(0)

    def run_case(key, d_bio, d_model, B, **kw):
        key, kx, kp = jax.random.split(key, 3)
        x = jax.random.normal(kx, (B, d_bio), jnp.float32)
        params = init_film_params(kp, d_bio, d_model)
        prep = prepare_film_params(params, d_model)     # one-time prep (hoisted)
        gamma, beta = film_forward_pallas(x, prep, **kw)
        gamma = jax.block_until_ready(gamma)
        beta = jax.block_until_ready(beta)
        g_ref, b_ref = film_forward_ref(x, params, matmul_dtype=jnp.bfloat16)
        assert gamma.shape == (B, d_model) and beta.shape == (B, d_model)
        assert bool(jnp.all(jnp.isfinite(gamma))) and bool(jnp.all(jnp.isfinite(beta)))
        assert jnp.allclose(gamma, g_ref, atol=3e-3, rtol=3e-3), \
            float(jnp.max(jnp.abs(gamma - g_ref)))
        assert jnp.allclose(beta, b_ref, atol=3e-3, rtol=3e-3), \
            float(jnp.max(jnp.abs(beta - b_ref)))
        return key

    # 1) tiny problem, default tiling (1 or 2 grid steps depending on chip)
    key = run_case(key, d_bio=8, d_model=32, B=16)
    # 2) multi-step grid + ragged batch padding, deeper extractor
    key = run_case(key, d_bio=8, d_model=64, B=20, tile_b=16)
    # 3) 128-aligned d_model -> lane-aligned in-kernel gamma/beta split
    key = run_case(key, d_bio=8, d_model=256, B=24)

    print("KERNEL_OK")
</pallas_src>

<mosaic_0001>
module attributes {stable_mosaic.version = 11 : i64} {
  func.func @_film_kernel(%arg0: i32, %arg1: memref<16x8xbf16, #tpu.memory_space<vmem>>, %arg2: memref<8x16xbf16, #tpu.memory_space<vmem>>, %arg3: memref<3x16xf32, #tpu.memory_space<vmem>>, %arg4: memref<16x160xbf16, #tpu.memory_space<vmem>>, %arg5: memref<1x160xf32, #tpu.memory_space<vmem>>, %arg6: memref<16x32xf32, #tpu.memory_space<vmem>>, %arg7: memref<16x32xf32, #tpu.memory_space<vmem>>) attributes {dimension_semantics = [#tpu.dimension_semantics<parallel>], iteration_bounds = array<i64: 1>, scalar_prefetch = 0 : i64, scratch_operands = 0 : i64, tpu.core_type = #tpu.core_type<tc>, window_params = [{transform_indices = @transform_0, window_bounds = array<i64: 16, 8>}, {pipeline_mode = #tpu.pipeline_mode<synchronous>, transform_indices = @transform_1, window_bounds = array<i64: 8, 16>}, {pipeline_mode = #tpu.pipeline_mode<synchronous>, transform_indices = @transform_2, window_bounds = array<i64: 3, 16>}, {pipeline_mode = #tpu.pipeline_mode<synchronous>, transform_indices = @transform_3, window_bounds = array<i64: 16, 160>}, {pipeline_mode = #tpu.pipeline_mode<synchronous>, transform_indices = @transform_4, window_bounds = array<i64: 1, 160>}, {transform_indices = @transform_5, window_bounds = array<i64: 16, 32>}, {transform_indices = @transform_6, window_bounds = array<i64: 16, 32>}]} {
    %c0 = arith.constant 0 : index
    %c0_0 = arith.constant 0 : index
    %0 = vector.load %arg1[%c0, %c0_0] : memref<16x8xbf16, #tpu.memory_space<vmem>>, vector<16x8xbf16>
    %c0_1 = arith.constant 0 : index
    %c0_2 = arith.constant 0 : index
    %1 = vector.load %arg2[%c0_1, %c0_2] : memref<8x16xbf16, #tpu.memory_space<vmem>>, vector<8x16xbf16>
    %c0_3 = arith.constant 0 : index
    %c0_4 = arith.constant 0 : index
    %2 = vector.load %arg3[%c0_3, %c0_4] : memref<3x16xf32, #tpu.memory_space<vmem>>, vector<3x16xf32>
    %cst = arith.constant dense<0.000000e+00> : vector<16x16xf32>
    %3 = tpu.matmul %0, %1, %cst {dimension_numbers = #tpu.dot_dimension_numbers<[1], [0], [0], [1], [0, 0, 1, 1], [], []>} : vector<16x8xbf16>, vector<8x16xbf16>, vector<16x16xf32> -> vector<16x16xf32>
    %4 = vector.extract_strided_slice %2 {offsets = [0, 0], sizes = [1, 16], strides = [1, 1]} : vector<3x16xf32> to vector<1x16xf32>
    %5 = vector.broadcast %4 : vector<1x16xf32> to vector<16x16xf32>
    %6 = arith.addf %3, %5 : vector<16x16xf32>
    %cst_5 = arith.constant dense<0.000000e+00> : vector<16xf32>
    %7 = vector.multi_reduction <add>, %6, %cst_5 [1] : vector<16x16xf32> to vector<16xf32>
    %8 = vector.shape_cast %7 : vector<16xf32> to vector<16x1xf32>
    %cst_6 = arith.constant 1.600000e+01 : f32
    %9 = vector.broadcast %cst_6 : f32 to vector<16x1xf32>
    %10 = arith.divf %8, %9 : vector<16x1xf32>
    %11 = arith.mulf %6, %6 : vector<16x16xf32>
    %cst_7 = arith.constant dense<0.000000e+00> : vector<16xf32>
    %12 = vector.multi_reduction <add>, %11, %cst_7 [1] : vector<16x16xf32> to vector<16xf32>
    %13 = vector.shape_cast %12 : vector<16xf32> to vector<16x1xf32>
    %cst_8 = arith.constant 1.600000e+01 : f32
    %14 = vector.broadcast %cst_8 : f32 to vector<16x1xf32>
    %15 = arith.divf %13, %14 : vector<16x1xf32>
    %16 = arith.mulf %10, %10 : vector<16x1xf32>
    %17 = arith.subf %15, %16 : vector<16x1xf32>
    %cst_9 = arith.constant 0.000000e+00 : f32
    %18 = vector.broadcast %cst_9 : f32 to vector<16x1xf32>
    %19 = arith.maximumf %17, %18 : vector<16x1xf32>
    %cst_10 = arith.constant 9.99999974E-6 : f32
    %20 = vector.broadcast %cst_10 : f32 to vector<16x1xf32>
    %21 = arith.addf %19, %20 : vector<16x1xf32>
    %22 = math.rsqrt %21 : vector<16x1xf32>
    %23 = vector.extract_strided_slice %2 {offsets = [1, 0], sizes = [1, 16], strides = [1, 1]} : vector<3x16xf32> to vector<1x16xf32>
    %24 = vector.broadcast %22 : vector<16x1xf32> to vector<16x16xf32>
    %25 = vector.broadcast %23 : vector<1x16xf32> to vector<16x16xf32>
    %26 = arith.mulf %24, %25 : vector<16x16xf32>
    %27 = vector.extract_strided_slice %2 {offsets = [2, 0], sizes = [1, 16], strides = [1, 1]} : vector<3x16xf32> to vector<1x16xf32>
    %28 = vector.broadcast %10 : vector<16x1xf32> to vector<16x16xf32>
    %29 = arith.mulf %28, %26 : vector<16x16xf32>
    %30 = vector.broadcast %27 : vector<1x16xf32> to vector<16x16xf32>
    %31 = arith.subf %30, %29 : vector<16x16xf32>
    %32 = arith.mulf %6, %26 : vector<16x16xf32>
    %33 = arith.addf %32, %31 : vector<16x16xf32>
    %cst_11 = arith.constant 0.00999999977 : f32
    %34 = vector.broadcast %cst_11 : f32 to vector<16x16xf32>
    %35 = arith.mulf %34, %33 : vector<16x16xf32>
    %36 = arith.maximumf %33, %35 : vector<16x16xf32>
    %37 = arith.truncf %36 : vector<16x16xf32> to vector<16x16xbf16>
    %c0_12 = arith.constant 0 : index
    %c0_13 = arith.constant 0 : index
    %38 = vector.load %arg4[%c0_12, %c0_13] : memref<16x160xbf16, #tpu.memory_space<vmem>>, vector<16x160xbf16>
    %c0_14 = arith.constant 0 : index
    %c0_15 = arith.constant 0 : index
    %39 = vector.load %arg5[%c0_14, %c0_15] : memref<1x160xf32, #tpu.memory_space<vmem>>, vector<1x160xf32>
    %cst_16 = arith.constant dense<0.000000e+00> : vector<16x160xf32>
    %40 = tpu.matmul %37, %38, %cst_16 {dimension_numbers = #tpu.dot_dimension_numbers<[1], [0], [0], [1], [0, 0, 1, 1], [], []>} : vector<16x16xbf16>, vector<16x160xbf16>, vector<16x160xf32> -> vector<16x160xf32>
    %41 = vector.broadcast %39 : vector<1x160xf32> to vector<16x160xf32>
    %42 = arith.addf %40, %41 : vector<16x160xf32>
    %43 = vector.extract_strided_slice %42 {offsets = [0, 0], sizes = [16, 32], strides = [1, 1]} : vector<16x160xf32> to vector<16x32xf32>
    %c0_17 = arith.constant 0 : index
    %c0_18 = arith.constant 0 : index
    %44 = vector.load %arg6[%c0_17, %c0_18] : memref<16x32xf32, #tpu.memory_space<vmem>>, vector<16x32xf32>
    tpu.vector_store %arg6[%c0_17, %c0_18], %43 {strides = array<i32>} : memref<16x32xf32, #tpu.memory_space<vmem>>, vector<16x32xf32>,
    %45 = vector.extract_strided_slice %42 {offsets = [0, 128], sizes = [16, 32], strides = [1, 1]} : vector<16x160xf32> to vector<16x32xf32>
    %c0_19 = arith.constant 0 : index
    %c0_20 = arith.constant 0 : index
    %46 = vector.load %arg7[%c0_19, %c0_20] : memref<16x32xf32, #tpu.memory_space<vmem>>, vector<16x32xf32>
    tpu.vector_store %arg7[%c0_19, %c0_20], %45 {strides = array<i32>} : memref<16x32xf32, #tpu.memory_space<vmem>>, vector<16x32xf32>,
    return
  }
  func.func @transform_0(%arg0: i32) -> (i32, i32) {
    %c0_i32 = arith.constant 0 : i32
    %c0_i32_0 = arith.constant 0 : i32
    return %arg0, %c0_i32 : i32, i32
  }
  func.func @transform_1(%arg0: i32) -> (i32, i32) {
    %c0_i32 = arith.constant 0 : i32
    %c0_i32_0 = arith.constant 0 : i32
    %c0_i32_1 = arith.constant 0 : i32
    return %c0_i32, %c0_i32_0 : i32, i32
  }
  func.func @transform_2(%arg0: i32) -> (i32, i32) {
    %c0_i32 = arith.constant 0 : i32
    %c0_i32_0 = arith.constant 0 : i32
    %c0_i32_1 = arith.constant 0 : i32
    return %c0_i32, %c0_i32_0 : i32, i32
  }
  func.func @transform_3(%arg0: i32) -> (i32, i32) {
    %c0_i32 = arith.constant 0 : i32
    %c0_i32_0 = arith.constant 0 : i32
    %c0_i32_1 = arith.constant 0 : i32
    return %c0_i32, %c0_i32_0 : i32, i32
  }
  func.func @transform_4(%arg0: i32) -> (i32, i32) {
    %c0_i32 = arith.constant 0 : i32
    %c0_i32_0 = arith.constant 0 : i32
    %c0_i32_1 = arith.constant 0 : i32
    return %c0_i32, %c0_i32_0 : i32, i32
  }
  func.func @transform_5(%arg0: i32) -> (i32, i32) {
    %c0_i32 = arith.constant 0 : i32
    %c0_i32_0 = arith.constant 0 : i32
    return %arg0, %c0_i32 : i32, i32
  }
  func.func @transform_6(%arg0: i32) -> (i32, i32) {
    %c0_i32 = arith.constant 0 : i32
    %c0_i32_0 = arith.constant 0 : i32
    return %arg0, %c0_i32 : i32, i32
  }
}

</mosaic_0001>

<llo_original>
// kernel: tpu_custom_call.1
$region0: #{tpu_custom_call.1}
  #allocation0 [shape = 'u32[]', space=smem, size = 0x4, offset = 0x4, fixed_abs, tag = 'smem constant byte address 0x4 - core index']
  #allocation1 [shape = 'u32[144,128]{1,0:T(1,128)}', space=vmem, size = 0x12000, scoped, tag = 'internal scratch']
  %s0 = inlined_call_operand.vmem [shape: bf16[16,8], index: 0, kind: input, shape index: {}]
  %s1 = inlined_call_operand.hbm [shape: bf16[8,16], index: 1, kind: input, shape index: {}]
  %s2 = inlined_call_operand.hbm [shape: f32[3,16], index: 2, kind: input, shape index: {}]
  %s3 = inlined_call_operand.vmem [shape: bf16[16,160], index: 3, kind: input, shape index: {}]
  %s4 = inlined_call_operand.vmem [shape: f32[1,160], index: 4, kind: input, shape index: {}]
  %s5 = inlined_call_operand.hbm [shape: f32[16,32], index: 5, kind: output, shape index: {0}]
  %s6 = inlined_call_operand.hbm [shape: f32[16,32], index: 6, kind: output, shape index: {1}]
  %7 = xla_tuple %s5, %s6
  %s8 = sld [smem:[#allocation0]]
  $region46: #{tpu_custom_call.1} parent=0
    _
  %s10 = ssub.s32 1, %s8
  %s11 = scalar_select 0, %s10, %s8
  $region1: #{tpu_custom_call.1} parent=0
    #allocation2 [shape = 'u8[2048]{0}', space=vmem, size = 0x800, scoped, tag = 'input window, operand 1, single buffered']
    #allocation3 [shape = 's32[1]{0}', space=sflag, size = 0x4, scoped, tag = 'scoped memory for tpu_custom_call.1']
    #allocation4 [shape = 's32[1]{0}', space=sflag, size = 0x4, scoped, tag = 'scoped memory for tpu_custom_call.1']
    #allocation5 [shape = 'u8[2048]{0}', space=vmem, size = 0x800, scoped, tag = 'input window, operand 2, single buffered']
    #allocation6 [shape = 's32[1]{0}', space=sflag, size = 0x4, scoped, tag = 'scoped memory for tpu_custom_call.1']
    #allocation7 [shape = 'u8[8192]{0}', space=vmem, size = 0x2000, scoped, tag = 'output window, operand 0, single buffered']
    #allocation8 [shape = 'u8[8192]{0}', space=vmem, size = 0x2000, scoped, tag = 'output window, operand 1, single buffered']
    #allocation9 [shape = 's32[1]{0}', space=sflag, size = 0x4, scoped, tag = 'scoped memory for tpu_custom_call.1']
    %12 = vsyncpa [#allocation3], 0
    %13 = vsyncpa [#allocation6], 0
    %14 = vsyncpa [#allocation4], 0
    %15 = vsyncpa [#allocation9], 0
    // Predicated region
    $region2: #{tpu_custom_call.1} parent=1 // pred_check
      _
    $region3: #{tpu_custom_call.1} parent=1 // pred_check_branch
      %17 = sbr.rel (0) target = $region5
    $region4: #{tpu_custom_call.1} parent=1 // pred_region
      _
    $region5: #{tpu_custom_call.1} parent=1 // pred_fallthru
      _
    // Predicated region
    $region6: #{tpu_custom_call.1} parent=1 // pred_check
      _
    $region7: #{tpu_custom_call.1} parent=1 // pred_check_branch
      %19 = sbr.rel (0) target = $region9
    $region8: #{tpu_custom_call.1} parent=1 // pred_region
      %s21 = ssub.s32 64, 64
      %22 = vsyncadd [#allocation3], %s21
      %s24 = sshll.u32 [#allocation2], 4
      %s25 = int_to_ptr.vmem [resolvable:$true] %s24
      %27 = dma.hbm_to_vmem [thread:$0]  %s1, 64, %s25, [#allocation3]
    $region9: #{tpu_custom_call.1} parent=1 // pred_fallthru
      _
    // Predicated region
    $region10: #{tpu_custom_call.1} parent=1 // pred_check
      _
    $region11: #{tpu_custom_call.1} parent=1 // pred_check_branch
      %29 = sbr.rel (0) target = $region13
    $region12: #{tpu_custom_call.1} parent=1 // pred_region
      %s31 = ssub.s32 64, 64
      %32 = vsyncadd [#allocation6], %s31
      %s34 = sshll.u32 [#allocation5], 4
      %s35 = int_to_ptr.vmem [resolvable:$true] %s34
      %37 = dma.hbm_to_vmem [thread:$0]  %s2, 64, %s35, [#allocation6]
    $region13: #{tpu_custom_call.1} parent=1 // pred_fallthru
      _
    // Predicated region
    $region14: #{tpu_custom_call.1} parent=1 // pred_check
      _
    $region15: #{tpu_custom_call.1} parent=1 // pred_check_branch
      %39 = sbr.rel (0) target = $region17
    $region16: #{tpu_custom_call.1} parent=1 // pred_region
      _
    $region17: #{tpu_custom_call.1} parent=1 // pred_fallthru
      _
    // Predicated region
    $region18: #{tpu_custom_call.1} parent=1 // pred_check
      _
    $region19: #{tpu_custom_call.1} parent=1 // pred_check_branch
      %41 = sbr.rel (0) target = $region21
    $region20: #{tpu_custom_call.1} parent=1 // pred_region
      _
    $region21: #{tpu_custom_call.1} parent=1 // pred_fallthru
      _
    // Predicated region
    $region22: #{tpu_custom_call.1} parent=1 // pred_check
      _
    $region23: #{tpu_custom_call.1} parent=1 // pred_check_branch
      %43 = sbr.rel (0) target = $region25
    $region24: #{tpu_custom_call.1} parent=1 // pred_region
      %44 = dma.done [#allocation3], 64
    $region25: #{tpu_custom_call.1} parent=1 // pred_fallthru
      _
    // Predicated region
    $region26: #{tpu_custom_call.1} parent=1 // pred_check
      _
    $region27: #{tpu_custom_call.1} parent=1 // pred_check_branch
      %46 = sbr.rel (0) target = $region29
    $region28: #{tpu_custom_call.1} parent=1 // pred_region
      %47 = dma.done [#allocation6], 64
    $region29: #{tpu_custom_call.1} parent=1 // pred_fallthru
      _
    %v49 = vld [vmem:[%s0] sm:$0xf]
    %v50 = vld [vmem:[%s0 + $0x4] sm:$0xf]
    %v51 = vld [vmem:[#allocation2] sm:$0xf]
    %v52 = vld [vmem:[#allocation5] sm:$0x7]
    %v53 = vlaneseq
    %v54 = vshrl.u32 %v53, 7
    %v55 = vsub.s32 0, %v54
    %v56 = vrot.slane %v52, %v55
    %v59 = vunpack.c.l.b16 %v49
    %v60 = vunpack.c.l.b16 %v50
    %v61 = vpack.c.b16 %v60, %v59
    %vm62 = vcmask 64512
    %v64 = vsel %vm62, %v61, 0
    %vm66 = vcmask 1043456
    %v68 = vsel %vm66, %v51, 0
    %70 = vmatprep.subr.bf16.mxu0 0
    %71 = vmatpush1.bf16.msra.mxu0 0
    %72 = vmatprep.subr.bf16.mxu0 0
    %73 = vmatpush1.bf16.msra.mxu0 0
    %74 = vmatprep.subr.bf16.mxu0 0
    %75 = vmatpush1.bf16.msra.mxu0 0
    %76 = vmatprep.subr.bf16.mxu0 0
    %77 = vmatpush1.bf16.msra.mxu0 0
    %78 = vmatprep.subr.bf16.mxu0 0
    %79 = vmatpush1.bf16.msra.mxu0 0
    %80 = vmatprep.subr.bf16.mxu0 0
    %81 = vmatpush1.bf16.msra.mxu0 0
    %82 = vmatprep.subr.bf16.mxu0 0
    %83 = vmatpush1.bf16.msra.mxu0 0
    %84 = vmatprep.subr.bf16.mxu0 0
    %85 = vmatpush1.bf16.msra.mxu0 %v68
    %86 = vmatprep.subr.bf16.mxu0 0
    %87 = vmatpush2.bf16.msra.mxu0 0
    %88 = vmatprep.subr.bf16.mxu0 0
    %89 = vmatpush2.bf16.msra.mxu0 0
    %90 = vmatprep.subr.bf16.mxu0 0
    %91 = vmatpush2.bf16.msra.mxu0 0
    %92 = vmatprep.subr.bf16.mxu0 0
    %93 = vmatpush2.bf16.msra.mxu0 0
    %94 = vmatprep.subr.bf16.mxu0 0
    %95 = vmatpush2.bf16.msra.mxu0 0
    %96 = vmatprep.subr.bf16.mxu0 0
    %97 = vmatpush2.bf16.msra.mxu0 0
    %98 = vmatprep.subr.bf16.mxu0 0
    %99 = vmatpush2.bf16.msra.mxu0 0
    %100 = vmatprep.subr.bf16.mxu0 0
    %101 = vmatpush2.bf16.msra.mxu0 0
    %102 = vmatprep.mubr.bf16.mxu0 0
    %103 = vmatmul.mubr.bf16.gmra.mxu0 %v64
    %v104 = vpop.f32.mrf.mxu0
    %v105 = vadd.f32 %v56, %v104
    %v106 = vpop.f32.mrf.mxu0
    %v107 = vpop.f32.mrf.mxu0
    %v108 = vadd.f32 %v56, %v107
    %v109 = vpop.f32.mrf.mxu0
    %110 = vdwg.mxu0
    %vm111 = vcmask 130048
    %v112 = vsel %vm111, %v105, 0.0
    %113 = vadd.xlane.f32.xlu0 %v112
    %v114 = vpop.xlane.xlu0 %113
    %v115 = vsel %vm111, %v108, 0.0
    %116 = vadd.xlane.f32.xlu0 %v115
    %v117 = vpop.xlane.xlu0 %116
    %v118 = vrcp.pop 16.0
    %v119 = vmul.f32 %v114, %v118
    %v120 = vmul.f32 %v117, %v118
    %v121 = vmul.f32 %v105, %v105
    %v122 = vmul.f32 %v108, %v108
    %v123 = vsel %vm111, %v121, 0.0
    %124 = vadd.xlane.f32.xlu0 %v123
    %v125 = vpop.xlane.xlu0 %124
    %v126 = vsel %vm111, %v122, 0.0
    %127 = vadd.xlane.f32.xlu0 %v126
    %v128 = vpop.xlane.xlu0 %127
    %v129 = vmul.f32 %v125, %v118
    %v130 = vmul.f32 %v128, %v118
    %v131 = vmul.f32 %v119, %v119
    %v132 = vmul.f32 %v120, %v120
    %v133 = vsub.f32 %v129, %v131
    %v134 = vsub.f32 %v130, %v132
    %v135 = vmax.f32 %v133, 0.0
    %v136 = vmax.f32 %v134, 0.0
    %v137 = vadd.f32 %v135, 1e-05
    %v138 = vadd.f32 %v136, 1e-05
    %v139 = vrsqrt.pop %v137
    %v140 = vrsqrt.pop %v138
    %v141 = vlaneseq
    %v142 = vshrl.u32 %v141, 7
    %v143 = vsub.s32 1, %v142
    %v144 = vrot.slane %v52, %v143
    %v145 = vmul.f32 %v139, %v144
    %v146 = vmul.f32 %v140, %v144
    %v147 = vmul.f32 %v119, %v145
    %v148 = vmul.f32 %v120, %v146
    %v149 = vlaneseq
    %v150 = vshrl.u32 %v149, 7
    %v151 = vsub.s32 2, %v150
    %v152 = vrot.slane %v52, %v151
    %v153 = vsub.f32 %v152, %v147
    %v154 = vsub.f32 %v152, %v148
    %v155 = vmul.f32 %v105, %v145
    %v156 = vmul.f32 %v108, %v146
    %v157 = vadd.f32 %v155, %v153
    %v158 = vadd.f32 %v156, %v154
    %v159 = vmul.f32 %v157, 0.01
    %v160 = vmul.f32 %v158, 0.01
    %v161 = vmax.f32 %v157, %v159
    %v162 = vmax.f32 %v158, %v160
    %v163 = vpack.c.bf16 %v162, %v161
    %v164 = vld [vmem:[%s3] sm:$0xff]
    %v165 = vld [vmem:[%s3 + $0x8] sm:$0xff]
    %v166 = vld [vmem:[%s4] sm:$0x3]
    %v168 = vlaneseq
    %v169 = vshrl.u32 %v168, 7
    %v170 = vsub.s32 0, %v169
    %v171 = vrot.slane %v166, %v170
    %v172 = vlaneseq
    %v173 = vshrl.u32 %v172, 7
    %v174 = vsub.s32 1, %v173
    %v175 = vrot.slane %v166, %v174
    %v180 = vunpack.c.l.b16 %v164
    %v181 = vunpack.c.h.b16 %v164
    %v182 = vunpack.c.l.b16 %v165
    %v183 = vunpack.c.h.b16 %v165
    %v184 = vpack.c.b16 %v182, %v180
    %v185 = vpack.c.b16 %v183, %v181
    %v189 = vsel %vm111, %v163, 0
    %191 = vmatprep.subr.bf16.mxu0 0
    %192 = vmatpush1.bf16.msra.mxu0 0
    %193 = vmatprep.subr.bf16.mxu0 0
    %194 = vmatpush1.bf16.msra.mxu0 0
    %195 = vmatprep.subr.bf16.mxu0 0
    %196 = vmatpush1.bf16.msra.mxu0 0
    %197 = vmatprep.subr.bf16.mxu0 0
    %198 = vmatpush1.bf16.msra.mxu0 0
    %199 = vmatprep.subr.bf16.mxu0 0
    %200 = vmatpush1.bf16.msra.mxu0 0
    %201 = vmatprep.subr.bf16.mxu0 0
    %202 = vmatpush1.bf16.msra.mxu0 0
    %203 = vmatprep.subr.bf16.mxu0 0
    %204 = vmatpush1.bf16.msra.mxu0 0
    %205 = vmatprep.subr.bf16.mxu0 %v185
    %206 = vmatpush1.bf16.msra.mxu0 %v184
    %207 = vmatprep.subr.bf16.mxu0 0
    %208 = vmatpush2.bf16.msra.mxu0 0
    %209 = vmatprep.subr.bf16.mxu0 0
    %210 = vmatpush2.bf16.msra.mxu0 0
    %211 = vmatprep.subr.bf16.mxu0 0
    %212 = vmatpush2.bf16.msra.mxu0 0
    %213 = vmatprep.subr.bf16.mxu0 0
    %214 = vmatpush2.bf16.msra.mxu0 0
    %215 = vmatprep.subr.bf16.mxu0 0
    %216 = vmatpush2.bf16.msra.mxu0 0
    %217 = vmatprep.subr.bf16.mxu0 0
    %218 = vmatpush2.bf16.msra.mxu0 0
    %219 = vmatprep.subr.bf16.mxu0 0
    %220 = vmatpush2.bf16.msra.mxu0 0
    %221 = vmatprep.subr.bf16.mxu0 0
    %222 = vmatpush2.bf16.msra.mxu0 0
    %223 = vmatprep.mubr.bf16.mxu0 0
    %224 = vmatmul.mubr.bf16.gmra.mxu0 %v189
    %v225 = vpop.f32.mrf.mxu0
    %v226 = vadd.f32 %v171, %v225
    %v227 = vpop.f32.mrf.mxu0
    %v228 = vadd.f32 %v175, %v227
    %v229 = vpop.f32.mrf.mxu0
    %v230 = vadd.f32 %v171, %v229
    %v231 = vpop.f32.mrf.mxu0
    %v232 = vadd.f32 %v175, %v231
    %233 = vdwg.mxu0
    %vm234 = vcmask 261120
    %235 = vst.msk [vmem:[#allocation7] sm:$0xff] %vm234, %v226
    %236 = vst.msk [vmem:[#allocation7 + $0x8] sm:$0xff] %vm234, %v230
    %237 = vst.msk [vmem:[#allocation8] sm:$0xff] %vm234, %v228
    %238 = vst.msk [vmem:[#allocation8 + $0x8] sm:$0xff] %vm234, %v232
    // Predicated region
    $region30: #{tpu_custom_call.1} parent=1 // pred_check
      _
    $region31: #{tpu_custom_call.1} parent=1 // pred_check_branch
      %240 = sbr.rel (0) target = $region33
    $region32: #{tpu_custom_call.1} parent=1 // pred_region
      %s242 = ssub.s32 256, 256
      %243 = vsyncadd [#allocation4], %s242
      %s244 = sshll.u32 [#allocation7], 4
      %s245 = int_to_ptr.vmem [resolvable:$true] %s244
      %250 = dma.vmem_to_hbm [thread:$0]  %s245, 256, %s5, [#allocation4], 128, 128, 8
    $region33: #{tpu_custom_call.1} parent=1 // pred_fallthru
      _
    // Predicated region
    $region34: #{tpu_custom_call.1} parent=1 // pred_check
      _
    $region35: #{tpu_custom_call.1} parent=1 // pred_check_branch
      %252 = sbr.rel (0) target = $region37
    $region36: #{tpu_custom_call.1} parent=1 // pred_region
      %s254 = ssub.s32 256, 256
      %255 = vsyncadd [#allocation9], %s254
      %s256 = sshll.u32 [#allocation8], 4
      %s257 = int_to_ptr.vmem [resolvable:$true] %s256
      %262 = dma.vmem_to_hbm [thread:$0]  %s257, 256, %s6, [#allocation9], 128, 128, 8
    $region37: #{tpu_custom_call.1} parent=1 // pred_fallthru
      _
    // Predicated region
    $region38: #{tpu_custom_call.1} parent=1 // pred_check
      _
    $region39: #{tpu_custom_call.1} parent=1 // pred_check_branch
      %264 = sbr.rel (0) target = $region41
    $region40: #{tpu_custom_call.1} parent=1 // pred_region
      %265 = dma.done [#allocation4], 256
    $region41: #{tpu_custom_call.1} parent=1 // pred_fallthru
      _
    // Predicated region
    $region42: #{tpu_custom_call.1} parent=1 // pred_check
      _
    $region43: #{tpu_custom_call.1} parent=1 // pred_check_branch
      %267 = sbr.rel (0) target = $region45
    $region44: #{tpu_custom_call.1} parent=1 // pred_region
      %268 = dma.done [#allocation9], 256
    $region45: #{tpu_custom_call.1} parent=1 // pred_fallthru
      _
    %269 = vsyncpa [#allocation3], 1
    %270 = vsyncpa [#allocation6], 1
    %271 = vsyncpa [#allocation4], 1
    %272 = vsyncpa [#allocation9], 1

</llo_original>
